<compile_context>
chip_gen: v5e
topology: v5e:2x2
jax: 0.10.0
libtpu: 0.0.40
codegen_flags: <defaults>
</compile_context>

<pallas_src>
import functools

import jax
import jax.numpy as jnp
from jax.experimental import pallas as pl
from jax.experimental.pallas import tpu as pltpu

D_IN = 446
D_H1 = 512
D_H2 = 128
D_OUT = 30


def _round_up(x, m):
    return (x + m - 1) // m * m


def _choose_bm(batch):
    """Batch tile policy:
      * single grid step for small batches (grid is a serial loop on v5e/v6e,
        and tiny M starves the MXU),
      * split into >=2 steps only when each step still feeds the MXU with
        M >= 128 (so v7x's two TensorCores both get meaningful work),
      * cap at 2048 to amortize the ~0.35us per-grid-step overhead while
        staying well inside VMEM on every generation."""
    bm = min(2048, _round_up(batch, 8))
    if batch >= 256 and pl.cdiv(batch, bm) < 2:
        bm = max(128, _round_up(pl.cdiv(batch, 2), 8))
    return bm


def mlp_kernel(x_ref, w1_ref, b1_ref, w2_ref, b2_ref, w3_ref, b3_ref, o_ref):
    # bf16 matmul operands, f32 MXU accumulation; bias-add / ReLU stay f32.
    x = x_ref[...].astype(jnp.bfloat16)
    # Layer 1: Linear(446 -> 512) + ReLU   (K=446: Mosaic pads the layout internally)
    h1 = jnp.dot(x, w1_ref[...].astype(jnp.bfloat16),
                 preferred_element_type=jnp.float32)
    h1 = jnp.maximum(h1 + b1_ref[...], 0.0)
    # Layer 2: Linear(512 -> 128) + ReLU
    h2 = jnp.dot(h1.astype(jnp.bfloat16), w2_ref[...].astype(jnp.bfloat16),
                 preferred_element_type=jnp.float32)
    h2 = jnp.maximum(h2 + b2_ref[...], 0.0)
    # Layer 3: Linear(128 -> 30), written directly to the 30-wide output
    out = jnp.dot(h2.astype(jnp.bfloat16), w3_ref[...].astype(jnp.bfloat16),
                  preferred_element_type=jnp.float32)
    o_ref[...] = out + b3_ref[...]


@functools.partial(jax.jit, static_argnames=("bm",))
def model_location30_forward(x, params, *, bm=None):
    """x: (B, 446) f32.  params: dict of (in, out) f32 weights and (1, out) f32 biases."""
    B, d_in = x.shape
    assert d_in == D_IN
    if bm is None:
        bm = _choose_bm(B)

    w1, b1 = params["w1"], params["b1"]
    w2, b2 = params["w2"], params["b2"]
    w3, b3 = params["w3"], params["b3"]

    grid = (pl.cdiv(B, bm),)

    # Weights/biases are grid-invariant: always block 0, single-buffered.
    def invariant(arr):
        return pl.BlockSpec(arr.shape, lambda i: (0,) * arr.ndim,
                            pipeline_mode=pl.Buffered(1))

    flops = 2 * B * (D_IN * D_H1 + D_H1 * D_H2 + D_H2 * D_OUT)
    bytes_accessed = (
        4 * B * D_IN + 4 * B * D_OUT                                   # x in, out (f32)
        + 4 * (D_IN * D_H1 + D_H1 + D_H1 * D_H2 + D_H2                # f32 weights/biases
               + D_H2 * D_OUT + D_OUT)
    )

    return pl.pallas_call(
        mlp_kernel,
        out_shape=jax.ShapeDtypeStruct((B, D_OUT), jnp.float32),
        grid_spec=pltpu.PrefetchScalarGridSpec(
            num_scalar_prefetch=0,
            grid=grid,
            in_specs=[
                pl.BlockSpec((bm, D_IN), lambda i: (i, 0)),   # x tile over batch (raw f32)
                invariant(w1), invariant(b1),
                invariant(w2), invariant(b2),
                invariant(w3), invariant(b3),
            ],
            out_specs=pl.BlockSpec((bm, D_OUT), lambda i: (i, 0)),
        ),
        compiler_params=pltpu.CompilerParams(
            dimension_semantics=("parallel",),
            vmem_limit_bytes=48 * 1024 * 1024,
        ),
        cost_estimate=pl.CostEstimate(
            flops=flops, transcendentals=0, bytes_accessed=bytes_accessed),
    )(x, w1, b1, w2, b2, w3, b3)


def init_params(key):
    """Deterministic init mimicking PyTorch's default Linear init
    (uniform(-1/sqrt(fan_in), 1/sqrt(fan_in)))."""
    def linear(key, fan_in, fan_out):
        kw, kb = jax.random.split(key)
        bound = 1.0 / jnp.sqrt(jnp.float32(fan_in))
        w = jax.random.uniform(kw, (fan_in, fan_out), jnp.float32, -bound, bound)
        b = jax.random.uniform(kb, (1, fan_out), jnp.float32, -bound, bound)
        return w, b

    k1, k2, k3 = jax.random.split(key, 3)
    w1, b1 = linear(k1, D_IN, D_H1)
    w2, b2 = linear(k2, D_H1, D_H2)
    w3, b3 = linear(k3, D_H2, D_OUT)
    return {"w1": w1, "b1": b1, "w2": w2, "b2": b2, "w3": w3, "b3": b3}


def reference_forward(x, p):
    """Pure-JAX reference mirroring the kernel's bf16-operand / f32-accumulate math."""
    bf = jnp.bfloat16
    h1 = jnp.maximum(
        jnp.dot(x.astype(bf), p["w1"].astype(bf),
                preferred_element_type=jnp.float32) + p["b1"], 0.0)
    h2 = jnp.maximum(
        jnp.dot(h1.astype(bf), p["w2"].astype(bf),
                preferred_element_type=jnp.float32) + p["b2"], 0.0)
    return jnp.dot(h2.astype(bf), p["w3"].astype(bf),
                   preferred_element_type=jnp.float32) + p["b3"]


if __name__ == "__main__":
    key = jax.random.PRNGKey(0)
    kp, kx = jax.random.split(key)

    params = init_params(kp)
    B = 16  # small demo batch -> single grid step, bm=16
    x = jax.random.normal(kx, (B, D_IN), jnp.float32)

    out = model_location30_forward(x, params)
    out = jax.block_until_ready(out)
    assert out.shape == (B, D_OUT), out.shape

    ref = reference_forward(x, params)
    assert jnp.allclose(out, ref, atol=2e-3, rtol=5e-3), \
        float(jnp.max(jnp.abs(out - ref)))

    print("KERNEL_OK")
</pallas_src>

<mosaic_0001>
module attributes {stable_mosaic.version = 11 : i64} {
  func.func @mlp_kernel(%arg0: i32, %arg1: memref<16x446xf32, #tpu.memory_space<vmem>>, %arg2: memref<446x512xf32, #tpu.memory_space<vmem>>, %arg3: memref<1x512xf32, #tpu.memory_space<vmem>>, %arg4: memref<512x128xf32, #tpu.memory_space<vmem>>, %arg5: memref<1x128xf32, #tpu.memory_space<vmem>>, %arg6: memref<128x30xf32, #tpu.memory_space<vmem>>, %arg7: memref<1x30xf32, #tpu.memory_space<vmem>>, %arg8: memref<16x30xf32, #tpu.memory_space<vmem>>) attributes {dimension_semantics = [#tpu.dimension_semantics<parallel>], iteration_bounds = array<i64: 1>, scalar_prefetch = 0 : i64, scratch_operands = 0 : i64, tpu.core_type = #tpu.core_type<tc>, window_params = [{transform_indices = @transform_0, window_bounds = array<i64: 16, 446>}, {pipeline_mode = #tpu.pipeline_mode<synchronous>, transform_indices = @transform_1, window_bounds = array<i64: 446, 512>}, {pipeline_mode = #tpu.pipeline_mode<synchronous>, transform_indices = @transform_2, window_bounds = array<i64: 1, 512>}, {pipeline_mode = #tpu.pipeline_mode<synchronous>, transform_indices = @transform_3, window_bounds = array<i64: 512, 128>}, {pipeline_mode = #tpu.pipeline_mode<synchronous>, transform_indices = @transform_4, window_bounds = array<i64: 1, 128>}, {pipeline_mode = #tpu.pipeline_mode<synchronous>, transform_indices = @transform_5, window_bounds = array<i64: 128, 30>}, {pipeline_mode = #tpu.pipeline_mode<synchronous>, transform_indices = @transform_6, window_bounds = array<i64: 1, 30>}, {transform_indices = @transform_7, window_bounds = array<i64: 16, 30>}]} {
    %c0 = arith.constant 0 : index
    %c0_0 = arith.constant 0 : index
    %0 = vector.load %arg1[%c0, %c0_0] : memref<16x446xf32, #tpu.memory_space<vmem>>, vector<16x446xf32>
    %1 = arith.truncf %0 : vector<16x446xf32> to vector<16x446xbf16>
    %c0_1 = arith.constant 0 : index
    %c0_2 = arith.constant 0 : index
    %2 = vector.load %arg2[%c0_1, %c0_2] : memref<446x512xf32, #tpu.memory_space<vmem>>, vector<446x512xf32>
    %3 = arith.truncf %2 : vector<446x512xf32> to vector<446x512xbf16>
    %cst = arith.constant dense<0.000000e+00> : vector<16x512xf32>
    %4 = tpu.matmul %1, %3, %cst {dimension_numbers = #tpu.dot_dimension_numbers<[1], [0], [0], [1], [0, 0, 1, 1], [], []>} : vector<16x446xbf16>, vector<446x512xbf16>, vector<16x512xf32> -> vector<16x512xf32>
    %c0_3 = arith.constant 0 : index
    %c0_4 = arith.constant 0 : index
    %5 = vector.load %arg3[%c0_3, %c0_4] : memref<1x512xf32, #tpu.memory_space<vmem>>, vector<1x512xf32>
    %6 = vector.broadcast %5 : vector<1x512xf32> to vector<16x512xf32>
    %7 = arith.addf %4, %6 : vector<16x512xf32>
    %cst_5 = arith.constant 0.000000e+00 : f32
    %8 = vector.broadcast %cst_5 : f32 to vector<16x512xf32>
    %9 = arith.maximumf %7, %8 : vector<16x512xf32>
    %10 = arith.truncf %9 : vector<16x512xf32> to vector<16x512xbf16>
    %c0_6 = arith.constant 0 : index
    %c0_7 = arith.constant 0 : index
    %11 = vector.load %arg4[%c0_6, %c0_7] : memref<512x128xf32, #tpu.memory_space<vmem>>, vector<512x128xf32>
    %12 = arith.truncf %11 : vector<512x128xf32> to vector<512x128xbf16>
    %cst_8 = arith.constant dense<0.000000e+00> : vector<16x128xf32>
    %13 = tpu.matmul %10, %12, %cst_8 {dimension_numbers = #tpu.dot_dimension_numbers<[1], [0], [0], [1], [0, 0, 1, 1], [], []>} : vector<16x512xbf16>, vector<512x128xbf16>, vector<16x128xf32> -> vector<16x128xf32>
    %c0_9 = arith.constant 0 : index
    %c0_10 = arith.constant 0 : index
    %14 = vector.load %arg5[%c0_9, %c0_10] : memref<1x128xf32, #tpu.memory_space<vmem>>, vector<1x128xf32>
    %15 = vector.broadcast %14 : vector<1x128xf32> to vector<16x128xf32>
    %16 = arith.addf %13, %15 : vector<16x128xf32>
    %cst_11 = arith.constant 0.000000e+00 : f32
    %17 = vector.broadcast %cst_11 : f32 to vector<16x128xf32>
    %18 = arith.maximumf %16, %17 : vector<16x128xf32>
    %19 = arith.truncf %18 : vector<16x128xf32> to vector<16x128xbf16>
    %c0_12 = arith.constant 0 : index
    %c0_13 = arith.constant 0 : index
    %20 = vector.load %arg6[%c0_12, %c0_13] : memref<128x30xf32, #tpu.memory_space<vmem>>, vector<128x30xf32>
    %21 = arith.truncf %20 : vector<128x30xf32> to vector<128x30xbf16>
    %cst_14 = arith.constant dense<0.000000e+00> : vector<16x30xf32>
    %22 = tpu.matmul %19, %21, %cst_14 {dimension_numbers = #tpu.dot_dimension_numbers<[1], [0], [0], [1], [0, 0, 1, 1], [], []>} : vector<16x128xbf16>, vector<128x30xbf16>, vector<16x30xf32> -> vector<16x30xf32>
    %c0_15 = arith.constant 0 : index
    %c0_16 = arith.constant 0 : index
    %23 = vector.load %arg7[%c0_15, %c0_16] : memref<1x30xf32, #tpu.memory_space<vmem>>, vector<1x30xf32>
    %24 = vector.broadcast %23 : vector<1x30xf32> to vector<16x30xf32>
    %25 = arith.addf %22, %24 : vector<16x30xf32>
    %c0_17 = arith.constant 0 : index
    %c0_18 = arith.constant 0 : index
    %26 = vector.load %arg8[%c0_17, %c0_18] : memref<16x30xf32, #tpu.memory_space<vmem>>, vector<16x30xf32>
    tpu.vector_store %arg8[%c0_17, %c0_18], %25 {strides = array<i32>} : memref<16x30xf32, #tpu.memory_space<vmem>>, vector<16x30xf32>,
    return
  }
  func.func @transform_0(%arg0: i32) -> (i32, i32) {
    %c0_i32 = arith.constant 0 : i32
    %c0_i32_0 = arith.constant 0 : i32
    return %arg0, %c0_i32 : i32, i32
  }
  func.func @transform_1(%arg0: i32) -> (i32, i32) {
    %c0_i32 = arith.constant 0 : i32
    %c0_i32_0 = arith.constant 0 : i32
    %c0_i32_1 = arith.constant 0 : i32
    return %c0_i32, %c0_i32_0 : i32, i32
  }
  func.func @transform_2(%arg0: i32) -> (i32, i32) {
    %c0_i32 = arith.constant 0 : i32
    %c0_i32_0 = arith.constant 0 : i32
    %c0_i32_1 = arith.constant 0 : i32
    return %c0_i32, %c0_i32_0 : i32, i32
  }
  func.func @transform_3(%arg0: i32) -> (i32, i32) {
    %c0_i32 = arith.constant 0 : i32
    %c0_i32_0 = arith.constant 0 : i32
    %c0_i32_1 = arith.constant 0 : i32
    return %c0_i32, %c0_i32_0 : i32, i32
  }
  func.func @transform_4(%arg0: i32) -> (i32, i32) {
    %c0_i32 = arith.constant 0 : i32
    %c0_i32_0 = arith.constant 0 : i32
    %c0_i32_1 = arith.constant 0 : i32
    return %c0_i32, %c0_i32_0 : i32, i32
  }
  func.func @transform_5(%arg0: i32) -> (i32, i32) {
    %c0_i32 = arith.constant 0 : i32
    %c0_i32_0 = arith.constant 0 : i32
    %c0_i32_1 = arith.constant 0 : i32
    return %c0_i32, %c0_i32_0 : i32, i32
  }
  func.func @transform_6(%arg0: i32) -> (i32, i32) {
    %c0_i32 = arith.constant 0 : i32
    %c0_i32_0 = arith.constant 0 : i32
    %c0_i32_1 = arith.constant 0 : i32
    return %c0_i32, %c0_i32_0 : i32, i32
  }
  func.func @transform_7(%arg0: i32) -> (i32, i32) {
    %c0_i32 = arith.constant 0 : i32
    %c0_i32_0 = arith.constant 0 : i32
    return %arg0, %c0_i32 : i32, i32
  }
}

</mosaic_0001>

<llo_original>
// kernel: model_location30_forward.1
$region0: #{model_location30_forward.1}
  #allocation0 [shape = 'u32[]', space=smem, size = 0x4, offset = 0x4, fixed_abs, tag = 'smem constant byte address 0x4 - core index']
  #allocation1 [shape = 'u32[72,128]{1,0:T(1,128)}', space=vmem, size = 0x9000, scoped, tag = 'internal scratch']
  %s0 = inlined_call_operand.vmem [shape: f32[16,446], index: 0, kind: input, shape index: {}]
  %s1 = inlined_call_operand.hbm [shape: f32[446,512], index: 1, kind: input, shape index: {}]
  %s2 = inlined_call_operand.vmem [shape: f32[1,512], index: 2, kind: input, shape index: {}]
  %s3 = inlined_call_operand.hbm [shape: f32[512,128], index: 3, kind: input, shape index: {}]
  %s4 = inlined_call_operand.vmem [shape: f32[1,128], index: 4, kind: input, shape index: {}]
  %s5 = inlined_call_operand.vmem [shape: f32[128,30], index: 5, kind: input, shape index: {}]
  %s6 = inlined_call_operand.vmem [shape: f32[1,30], index: 6, kind: input, shape index: {}]
  %s7 = inlined_call_operand.hbm [shape: f32[16,30], index: 7, kind: output, shape index: {}]
  %s8 = sld [smem:[#allocation0]]
  $region46: #{model_location30_forward.1} parent=0
    _
  %s10 = ssub.s32 1, %s8
  %s11 = scalar_select 0, %s10, %s8
  $region1: #{model_location30_forward.1} parent=0
    #allocation2 [shape = 'u8[917504]{0}', space=vmem, size = 0xe0000, scoped, tag = 'input window, operand 1, single buffered']
    #allocation3 [shape = 's32[1]{0}', space=sflag, size = 0x4, scoped, tag = 'scoped memory for model_location30_forward.1']
    #allocation4 [shape = 's32[1]{0}', space=sflag, size = 0x4, scoped, tag = 'scoped memory for model_location30_forward.1']
    #allocation5 [shape = 'u8[262144]{0}', space=vmem, size = 0x40000, scoped, tag = 'input window, operand 3, single buffered']
    #allocation6 [shape = 's32[1]{0}', space=sflag, size = 0x4, scoped, tag = 'scoped memory for model_location30_forward.1']
    #allocation7 [shape = 'u8[8192]{0}', space=vmem, size = 0x2000, scoped, tag = 'output window, operand 0, single buffered']
    %12 = vsyncpa [#allocation3], 0
    %13 = vsyncpa [#allocation6], 0
    %14 = vsyncpa [#allocation4], 0
    // Predicated region
    $region2: #{model_location30_forward.1} parent=1 // pred_check
      _
    $region3: #{model_location30_forward.1} parent=1 // pred_check_branch
      %16 = sbr.rel (0) target = $region5
    $region4: #{model_location30_forward.1} parent=1 // pred_region
      _
    $region5: #{model_location30_forward.1} parent=1 // pred_fallthru
      _
    // Predicated region
    $region6: #{model_location30_forward.1} parent=1 // pred_check
      _
    $region7: #{model_location30_forward.1} parent=1 // pred_check_branch
      %18 = sbr.rel (0) target = $region9
    $region8: #{model_location30_forward.1} parent=1 // pred_region
      %20 = vsyncadd [#allocation3], 0
      %s21 = sshll.u32 %s1, 4
      %s22 = int_to_ptr.hbm [resolvable:$true] %s21
      %s23 = sshll.u32 [#allocation2], 4
      %s24 = int_to_ptr.vmem [resolvable:$true] %s23
      %29 = dma.hbm_to_vmem [thread:$0]  %s22, 28672, %s24, [#allocation3], 512, 512, 32
    $region9: #{model_location30_forward.1} parent=1 // pred_fallthru
      _
    // Predicated region
    $region10: #{model_location30_forward.1} parent=1 // pred_check
      _
    $region11: #{model_location30_forward.1} parent=1 // pred_check_branch
      %31 = sbr.rel (0) target = $region13
    $region12: #{model_location30_forward.1} parent=1 // pred_region
      _
    $region13: #{model_location30_forward.1} parent=1 // pred_fallthru
      _
    // Predicated region
    $region14: #{model_location30_forward.1} parent=1 // pred_check
      _
    $region15: #{model_location30_forward.1} parent=1 // pred_check_branch
      %33 = sbr.rel (0) target = $region17
    $region16: #{model_location30_forward.1} parent=1 // pred_region
      %35 = vsyncadd [#allocation6], 0
      %s36 = sshll.u32 %s3, 4
      %s37 = int_to_ptr.hbm [resolvable:$true] %s36
      %s38 = sshll.u32 [#allocation5], 4
      %s39 = int_to_ptr.vmem [resolvable:$true] %s38
      %44 = dma.hbm_to_vmem [thread:$0]  %s37, 8192, %s39, [#allocation6], 128, 128, 8
    $region17: #{model_location30_forward.1} parent=1 // pred_fallthru
      _
    // Predicated region
    $region18: #{model_location30_forward.1} parent=1 // pred_check
      _
    $region19: #{model_location30_forward.1} parent=1 // pred_check_branch
      %46 = sbr.rel (0) target = $region21
    $region20: #{model_location30_forward.1} parent=1 // pred_region
      _
    $region21: #{model_location30_forward.1} parent=1 // pred_fallthru
      _
    // Predicated region
    $region22: #{model_location30_forward.1} parent=1 // pred_check
      _
    $region23: #{model_location30_forward.1} parent=1 // pred_check_branch
      %48 = sbr.rel (0) target = $region25
    $region24: #{model_location30_forward.1} parent=1 // pred_region
      _
    $region25: #{model_location30_forward.1} parent=1 // pred_fallthru
      _
    // Predicated region
    $region26: #{model_location30_forward.1} parent=1 // pred_check
      _
    $region27: #{model_location30_forward.1} parent=1 // pred_check_branch
      %50 = sbr.rel (0) target = $region29
    $region28: #{model_location30_forward.1} parent=1 // pred_region
      _
    $region29: #{model_location30_forward.1} parent=1 // pred_fallthru
      _
    // Predicated region
    $region30: #{model_location30_forward.1} parent=1 // pred_check
      _
    $region31: #{model_location30_forward.1} parent=1 // pred_check_branch
      %52 = sbr.rel (0) target = $region33
    $region32: #{model_location30_forward.1} parent=1 // pred_region
      %54 = dma.done [#allocation3], 28672
    $region33: #{model_location30_forward.1} parent=1 // pred_fallthru
      _
    // Predicated region
    $region34: #{model_location30_forward.1} parent=1 // pred_check
      _
    $region35: #{model_location30_forward.1} parent=1 // pred_check_branch
      %56 = sbr.rel (0) target = $region37
    $region36: #{model_location30_forward.1} parent=1 // pred_region
      %58 = dma.done [#allocation6], 8192
    $region37: #{model_location30_forward.1} parent=1 // pred_fallthru
      _
    %v60 = vld [vmem:[%s0] sm:$0xff]
    %v61 = vld [vmem:[%s0 + $0x8] sm:$0xff]
    %v62 = vld [vmem:[%s0 + $0x10] sm:$0xff]
    %v63 = vld [vmem:[%s0 + $0x18] sm:$0xff]
    %v64 = vld [vmem:[%s0 + $0x20] sm:$0xff]
    %v65 = vld [vmem:[%s0 + $0x28] sm:$0xff]
    %v66 = vld [vmem:[%s0 + $0x30] sm:$0xff]
    %v67 = vld [vmem:[%s0 + $0x38] sm:$0xff]
    %v68 = vpack.c.bf16 %v64, %v60
    %v69 = vpack.c.bf16 %v65, %v61
    %v70 = vpack.c.bf16 %v66, %v62
    %v71 = vpack.c.bf16 %v67, %v63
    %v72 = vld [vmem:[#allocation2] sm:$0xff]
    %v73 = vld [vmem:[#allocation2 + $0x8] sm:$0xff]
    %v74 = vld [vmem:[#allocation2 + $0x10] sm:$0xff]
    %v75 = vld [vmem:[#allocation2 + $0x18] sm:$0xff]
    %v76 = vld [vmem:[#allocation2 + $0x20] sm:$0xff]
    %v77 = vld [vmem:[#allocation2 + $0x28] sm:$0xff]
    %v78 = vld [vmem:[#allocation2 + $0x30] sm:$0xff]
    %v79 = vld [vmem:[#allocation2 + $0x38] sm:$0xff]
    %v80 = vld [vmem:[#allocation2 + $0x40] sm:$0xff]
    %v81 = vld [vmem:[#allocation2 + $0x48] sm:$0xff]
    %v82 = vld [vmem:[#allocation2 + $0x50] sm:$0xff]
    %v83 = vld [vmem:[#allocation2 + $0x58] sm:$0xff]
    %v84 = vld [vmem:[#allocation2 + $0x60] sm:$0xff]
    %v85 = vld [vmem:[#allocation2 + $0x68] sm:$0xff]
    %v86 = vld [vmem:[#allocation2 + $0x70] sm:$0xff]
    %v87 = vld [vmem:[#allocation2 + $0x78] sm:$0xff]
    %v88 = vld [vmem:[#allocation2 + $0x80] sm:$0xff]
    %v89 = vld [vmem:[#allocation2 + $0x88] sm:$0xff]
    %v90 = vld [vmem:[#allocation2 + $0x90] sm:$0xff]
    %v91 = vld [vmem:[#allocation2 + $0x98] sm:$0xff]
    %v92 = vld [vmem:[#allocation2 + $0xa0] sm:$0xff]
    %v93 = vld [vmem:[#allocation2 + $0xa8] sm:$0xff]
    %v94 = vld [vmem:[#allocation2 + $0xb0] sm:$0xff]
    %v95 = vld [vmem:[#allocation2 + $0xb8] sm:$0xff]
    %v96 = vld [vmem:[#allocation2 + $0xc0] sm:$0xff]
    %v97 = vld [vmem:[#allocation2 + $0xc8] sm:$0xff]
    %v98 = vld [vmem:[#allocation2 + $0xd0] sm:$0xff]
    %v99 = vld [vmem:[#allocation2 + $0xd8] sm:$0xff]
    %v100 = vld [vmem:[#allocation2 + $0xe0] sm:$0xff]
    %v101 = vld [vmem:[#allocation2 + $0xe8] sm:$0xff]
    %v102 = vld [vmem:[#allocation2 + $0xf0] sm:$0xff]
    %v103 = vld [vmem:[#allocation2 + $0xf8] sm:$0xff]
    %v104 = vld [vmem:[#allocation2 + $0x100] sm:$0xff]
    %v105 = vld [vmem:[#allocation2 + $0x108] sm:$0xff]
    %v106 = vld [vmem:[#allocation2 + $0x110] sm:$0xff]
    %v107 = vld [vmem:[#allocation2 + $0x118] sm:$0xff]
    %v108 = vld [vmem:[#allocation2 + $0x120] sm:$0xff]
    %v109 = vld [vmem:[#allocation2 + $0x128] sm:$0xff]
    %v110 = vld [vmem:[#allocation2 + $0x130] sm:$0xff]
    %v111 = vld [vmem:[#allocation2 + $0x138] sm:$0xff]
    %v112 = vld [vmem:[#allocation2 + $0x140] sm:$0xff]
    %v113 = vld [vmem:[#allocation2 + $0x148] sm:$0xff]
    %v114 = vld [vmem:[#allocation2 + $0x150] sm:$0xff]
    %v115 = vld [vmem:[#allocation2 + $0x158] sm:$0xff]
    %v116 = vld [vmem:[#allocation2 + $0x160] sm:$0xff]
    %v117 = vld [vmem:[#allocation2 + $0x168] sm:$0xff]
    %v118 = vld [vmem:[#allocation2 + $0x170] sm:$0xff]
    %v119 = vld [vmem:[#allocation2 + $0x178] sm:$0xff]
    %v120 = vld [vmem:[#allocation2 + $0x180] sm:$0xff]
    %v121 = vld [vmem:[#allocation2 + $0x188] sm:$0xff]
    %v122 = vld [vmem:[#allocation2 + $0x190] sm:$0xff]
    %v123 = vld [vmem:[#allocation2 + $0x198] sm:$0xff]
    %v124 = vld [vmem:[#allocation2 + $0x1a0] sm:$0xff]
    %v125 = vld [vmem:[#allocation2 + $0x1a8] sm:$0xff]
    %v126 = vld [vmem:[#allocation2 + $0x1b0] sm:$0xff]
    %v127 = vld [vmem:[#allocation2 + $0x1b8] sm:$0xff]
    %v128 = vld [vmem:[#allocation2 + $0x1c0] sm:$0xff]
    %v129 = vld [vmem:[#allocation2 + $0x1c8] sm:$0xff]
    %v130 = vld [vmem:[#allocation2 + $0x1d0] sm:$0xff]
    %v131 = vld [vmem:[#allocation2 + $0x1d8] sm:$0xff]
    %v132 = vld [vmem:[#allocation2 + $0x1e0] sm:$0xff]
    %v133 = vld [vmem:[#allocation2 + $0x1e8] sm:$0xff]
    %v134 = vld [vmem:[#allocation2 + $0x1f0] sm:$0xff]
    %v135 = vld [vmem:[#allocation2 + $0x1f8] sm:$0xff]
    %v136 = vld [vmem:[#allocation2 + $0x200] sm:$0xff]
    %v137 = vld [vmem:[#allocation2 + $0x208] sm:$0xff]
    %v138 = vld [vmem:[#allocation2 + $0x210] sm:$0xff]
    %v139 = vld [vmem:[#allocation2 + $0x218] sm:$0xff]
    %v140 = vld [vmem:[#allocation2 + $0x220] sm:$0xff]
    %v141 = vld [vmem:[#allocation2 + $0x228] sm:$0xff]
    %v142 = vld [vmem:[#allocation2 + $0x230] sm:$0xff]
    %v143 = vld [vmem:[#allocation2 + $0x238] sm:$0xff]
    %v144 = vld [vmem:[#allocation2 + $0x240] sm:$0xff]
    %v145 = vld [vmem:[#allocation2 + $0x248] sm:$0xff]
    %v146 = vld [vmem:[#allocation2 + $0x250] sm:$0xff]
    %v147 = vld [vmem:[#allocation2 + $0x258] sm:$0xff]
    %v148 = vld [vmem:[#allocation2 + $0x260] sm:$0xff]
    %v149 = vld [vmem:[#allocation2 + $0x268] sm:$0xff]
    %v150 = vld [vmem:[#allocation2 + $0x270] sm:$0xff]
    %v151 = vld [vmem:[#allocation2 + $0x278] sm:$0xff]
    %v152 = vld [vmem:[#allocation2 + $0x280] sm:$0xff]
    %v153 = vld [vmem:[#allocation2 + $0x288] sm:$0xff]
    %v154 = vld [vmem:[#allocation2 + $0x290] sm:$0xff]
    %v155 = vld [vmem:[#allocation2 + $0x298] sm:$0xff]
    %v156 = vld [vmem:[#allocation2 + $0x2a0] sm:$0xff]
    %v157 = vld [vmem:[#allocation2 + $0x2a8] sm:$0xff]
    %v158 = vld [vmem:[#allocation2 + $0x2b0] sm:$0xff]
    %v159 = vld [vmem:[#allocation2 + $0x2b8] sm:$0xff]
    %v160 = vld [vmem:[#allocation2 + $0x2c0] sm:$0xff]
    %v161 = vld [vmem:[#allocation2 + $0x2c8] sm:$0xff]
    %v162 = vld [vmem:[#allocation2 + $0x2d0] sm:$0xff]
    %v163 = vld [vmem:[#allocation2 + $0x2d8] sm:$0xff]
    %v164 = vld [vmem:[#allocation2 + $0x2e0] sm:$0xff]
    %v165 = vld [vmem:[#allocation2 + $0x2e8] sm:$0xff]
    %v166 = vld [vmem:[#allocation2 + $0x2f0] sm:$0xff]
    %v167 = vld [vmem:[#allocation2 + $0x2f8] sm:$0xff]
    %v168 = vld [vmem:[#allocation2 + $0x300] sm:$0xff]
    %v169 = vld [vmem:[#allocation2 + $0x308] sm:$0xff]
    %v170 = vld [vmem:[#allocation2 + $0x310] sm:$0xff]
    %v171 = vld [vmem:[#allocation2 + $0x318] sm:$0xff]
    %v172 = vld [vmem:[#allocation2 + $0x320] sm:$0xff]
    %v173 = vld [vmem:[#allocation2 + $0x328] sm:$0xff]
    %v174 = vld [vmem:[#allocation2 + $0x330] sm:$0xff]
    %v175 = vld [vmem:[#allocation2 + $0x338] sm:$0xff]
    %v176 = vld [vmem:[#allocation2 + $0x340] sm:$0xff]
    %v177 = vld [vmem:[#allocation2 + $0x348] sm:$0xff]
    %v178 = vld [vmem:[#allocation2 + $0x350] sm:$0xff]
    %v179 = vld [vmem:[#allocation2 + $0x358] sm:$0xff]
    %v180 = vld [vmem:[#allocation2 + $0x360] sm:$0xff]
    %v181 = vld [vmem:[#allocation2 + $0x368] sm:$0xff]
    %v182 = vld [vmem:[#allocation2 + $0x370] sm:$0xff]
    %v183 = vld [vmem:[#allocation2 + $0x378] sm:$0xff]
    %v184 = vld [vmem:[#allocation2 + $0x380] sm:$0xff]
    %v185 = vld [vmem:[#allocation2 + $0x388] sm:$0xff]
    %v186 = vld [vmem:[#allocation2 + $0x390] sm:$0xff]
    %v187 = vld [vmem:[#allocation2 + $0x398] sm:$0xff]
    %v188 = vld [vmem:[#allocation2 + $0x3a0] sm:$0xff]
    %v189 = vld [vmem:[#allocation2 + $0x3a8] sm:$0xff]
    %v190 = vld [vmem:[#allocation2 + $0x3b0] sm:$0xff]
    %v191 = vld [vmem:[#allocation2 + $0x3b8] sm:$0xff]
    %v192 = vld [vmem:[#allocation2 + $0x3c0] sm:$0xff]
    %v193 = vld [vmem:[#allocation2 + $0x3c8] sm:$0xff]
    %v194 = vld [vmem:[#allocation2 + $0x3d0] sm:$0xff]
    %v195 = vld [vmem:[#allocation2 + $0x3d8] sm:$0xff]
    %v196 = vld [vmem:[#allocation2 + $0x3e0] sm:$0xff]
    %v197 = vld [vmem:[#allocation2 + $0x3e8] sm:$0xff]
    %v198 = vld [vmem:[#allocation2 + $0x3f0] sm:$0xff]
    %v199 = vld [vmem:[#allocation2 + $0x3f8] sm:$0xff]
    %v200 = vld [vmem:[#allocation2 + $0x400] sm:$0xff]
    %v201 = vld [vmem:[#allocation2 + $0x408] sm:$0xff]
    %v202 = vld [vmem:[#allocation2 + $0x410] sm:$0xff]
    %v203 = vld [vmem:[#allocation2 + $0x418] sm:$0xff]
    %v204 = vld [vmem:[#allocation2 + $0x420] sm:$0xff]
    %v205 = vld [vmem:[#allocation2 + $0x428] sm:$0xff]
    %v206 = vld [vmem:[#allocation2 + $0x430] sm:$0xff]
    %v207 = vld [vmem:[#allocation2 + $0x438] sm:$0xff]
    %v208 = vld [vmem:[#allocation2 + $0x440] sm:$0xff]
    %v209 = vld [vmem:[#allocation2 + $0x448] sm:$0xff]
    %v210 = vld [vmem:[#allocation2 + $0x450] sm:$0xff]
    %v211 = vld [vmem:[#allocation2 + $0x458] sm:$0xff]
    %v212 = vld [vmem:[#allocation2 + $0x460] sm:$0xff]
    %v213 = vld [vmem:[#allocation2 + $0x468] sm:$0xff]
    %v214 = vld [vmem:[#allocation2 + $0x470] sm:$0xff]
    %v215 = vld [vmem:[#allocation2 + $0x478] sm:$0xff]
    %v216 = vld [vmem:[#allocation2 + $0x480] sm:$0xff]
    %v217 = vld [vmem:[#allocation2 + $0x488] sm:$0xff]
    %v218 = vld [vmem:[#allocation2 + $0x490] sm:$0xff]
    %v219 = vld [vmem:[#allocation2 + $0x498] sm:$0xff]
    %v220 = vld [vmem:[#allocation2 + $0x4a0] sm:$0xff]
    %v221 = vld [vmem:[#allocation2 + $0x4a8] sm:$0xff]
    %v222 = vld [vmem:[#allocation2 + $0x4b0] sm:$0xff]
    %v223 = vld [vmem:[#allocation2 + $0x4b8] sm:$0xff]
    %v224 = vld [vmem:[#allocation2 + $0x4c0] sm:$0xff]
    %v225 = vld [vmem:[#allocation2 + $0x4c8] sm:$0xff]
    %v226 = vld [vmem:[#allocation2 + $0x4d0] sm:$0xff]
    %v227 = vld [vmem:[#allocation2 + $0x4d8] sm:$0xff]
    %v228 = vld [vmem:[#allocation2 + $0x4e0] sm:$0xff]
    %v229 = vld [vmem:[#allocation2 + $0x4e8] sm:$0xff]
    %v230 = vld [vmem:[#allocation2 + $0x4f0] sm:$0xff]
    %v231 = vld [vmem:[#allocation2 + $0x4f8] sm:$0xff]
    %v232 = vld [vmem:[#allocation2 + $0x500] sm:$0xff]
    %v233 = vld [vmem:[#allocation2 + $0x508] sm:$0xff]
    %v234 = vld [vmem:[#allocation2 + $0x510] sm:$0xff]
    %v235 = vld [vmem:[#allocation2 + $0x518] sm:$0xff]
    %v236 = vld [vmem:[#allocation2 + $0x520] sm:$0xff]
    %v237 = vld [vmem:[#allocation2 + $0x528] sm:$0xff]
    %v238 = vld [vmem:[#allocation2 + $0x530] sm:$0xff]
    %v239 = vld [vmem:[#allocation2 + $0x538] sm:$0xff]
    %v240 = vld [vmem:[#allocation2 + $0x540] sm:$0xff]
    %v241 = vld [vmem:[#allocation2 + $0x548] sm:$0xff]
    %v242 = vld [vmem:[#allocation2 + $0x550] sm:$0xff]
    %v243 = vld [vmem:[#allocation2 + $0x558] sm:$0xff]
    %v244 = vld [vmem:[#allocation2 + $0x560] sm:$0xff]
    %v245 = vld [vmem:[#allocation2 + $0x568] sm:$0xff]
    %v246 = vld [vmem:[#allocation2 + $0x570] sm:$0xff]
    %v247 = vld [vmem:[#allocation2 + $0x578] sm:$0xff]
    %v248 = vld [vmem:[#allocation2 + $0x580] sm:$0xff]
    %v249 = vld [vmem:[#allocation2 + $0x588] sm:$0xff]
    %v250 = vld [vmem:[#allocation2 + $0x590] sm:$0xff]
    %v251 = vld [vmem:[#allocation2 + $0x598] sm:$0xff]
    %v252 = vld [vmem:[#allocation2 + $0x5a0] sm:$0xff]
    %v253 = vld [vmem:[#allocation2 + $0x5a8] sm:$0xff]
    %v254 = vld [vmem:[#allocation2 + $0x5b0] sm:$0xff]
    %v255 = vld [vmem:[#allocation2 + $0x5b8] sm:$0xff]
    %v256 = vld [vmem:[#allocation2 + $0x5c0] sm:$0xff]
    %v257 = vld [vmem:[#allocation2 + $0x5c8] sm:$0xff]
    %v258 = vld [vmem:[#allocation2 + $0x5d0] sm:$0xff]
    %v259 = vld [vmem:[#allocation2 + $0x5d8] sm:$0xff]
    %v260 = vld [vmem:[#allocation2 + $0x5e0] sm:$0xff]
    %v261 = vld [vmem:[#allocation2 + $0x5e8] sm:$0xff]
    %v262 = vld [vmem:[#allocation2 + $0x5f0] sm:$0xff]
    %v263 = vld [vmem:[#allocation2 + $0x5f8] sm:$0xff]
    %v264 = vld [vmem:[#allocation2 + $0x600] sm:$0xff]
    %v265 = vld [vmem:[#allocation2 + $0x608] sm:$0xff]
    %v266 = vld [vmem:[#allocation2 + $0x610] sm:$0xff]
    %v267 = vld [vmem:[#allocation2 + $0x618] sm:$0xff]
    %v268 = vld [vmem:[#allocation2 + $0x620] sm:$0xff]
    %v269 = vld [vmem:[#allocation2 + $0x628] sm:$0xff]
    %v270 = vld [vmem:[#allocation2 + $0x630] sm:$0xff]
    %v271 = vld [vmem:[#allocation2 + $0x638] sm:$0xff]
    %v272 = vld [vmem:[#allocation2 + $0x640] sm:$0xff]
    %v273 = vld [vmem:[#allocation2 + $0x648] sm:$0xff]
    %v274 = vld [vmem:[#allocation2 + $0x650] sm:$0xff]
    %v275 = vld [vmem:[#allocation2 + $0x658] sm:$0xff]
    %v276 = vld [vmem:[#allocation2 + $0x660] sm:$0xff]
    %v277 = vld [vmem:[#allocation2 + $0x668] sm:$0xff]
    %v278 = vld [vmem:[#allocation2 + $0x670] sm:$0xff]
    %v279 = vld [vmem:[#allocation2 + $0x678] sm:$0xff]
    %v280 = vld [vmem:[#allocation2 + $0x680] sm:$0xff]
    %v281 = vld [vmem:[#allocation2 + $0x688] sm:$0xff]
    %v282 = vld [vmem:[#allocation2 + $0x690] sm:$0xff]
    %v283 = vld [vmem:[#allocation2 + $0x698] sm:$0xff]
    %v284 = vld [vmem:[#allocation2 + $0x6a0] sm:$0xff]
    %v285 = vld [vmem:[#allocation2 + $0x6a8] sm:$0xff]
    %v286 = vld [vmem:[#allocation2 + $0x6b0] sm:$0xff]
    %v287 = vld [vmem:[#allocation2 + $0x6b8] sm:$0xff]
    %v288 = vld [vmem:[#allocation2 + $0x6c0] sm:$0xff]
    %v289 = vld [vmem:[#allocation2 + $0x6c8] sm:$0xff]
    %v290 = vld [vmem:[#allocation2 + $0x6d0] sm:$0xff]
    %v291 = vld [vmem:[#allocation2 + $0x6d8] sm:$0xff]
    %v292 = vld [vmem:[#allocation2 + $0x6e0] sm:$0x3f]
    %v293 = vld [vmem:[#allocation2 + $0x6e8] sm:$0x3f]
    %v294 = vld [vmem:[#allocation2 + $0x6f0] sm:$0x3f]
    %v295 = vld [vmem:[#allocation2 + $0x6f8] sm:$0x3f]
    %v296 = vpack.c.bf16 %v76, %v72
    %v297 = vpack.c.bf16 %v77, %v73
    %v298 = vpack.c.bf16 %v78, %v74
    %v299 = vpack.c.bf16 %v79, %v75
    %v300 = vpack.c.bf16 %v84, %v80
    %v301 = vpack.c.bf16 %v85, %v81
    %v302 = vpack.c.bf16 %v86, %v82
    %v303 = vpack.c.bf16 %v87, %v83
    %v304 = vpack.c.bf16 %v92, %v88
    %v305 = vpack.c.bf16 %v93, %v89
    %v306 = vpack.c.bf16 %v94, %v90
    %v307 = vpack.c.bf16 %v95, %v91
    %v308 = vpack.c.bf16 %v100, %v96
    %v309 = vpack.c.bf16 %v101, %v97
    %v310 = vpack.c.bf16 %v102, %v98
    %v311 = vpack.c.bf16 %v103, %v99
    %v312 = vpack.c.bf16 %v108, %v104
    %v313 = vpack.c.bf16 %v109, %v105
    %v314 = vpack.c.bf16 %v110, %v106
    %v315 = vpack.c.bf16 %v111, %v107
    %v316 = vpack.c.bf16 %v116, %v112
    %v317 = vpack.c.bf16 %v117, %v113
    %v318 = vpack.c.bf16 %v118, %v114
    %v319 = vpack.c.bf16 %v119, %v115
    %v320 = vpack.c.bf16 %v124, %v120
    %v321 = vpack.c.bf16 %v125, %v121
    %v322 = vpack.c.bf16 %v126, %v122
    %v323 = vpack.c.bf16 %v127, %v123
    %v324 = vpack.c.bf16 %v132, %v128
    %v325 = vpack.c.bf16 %v133, %v129
    %v326 = vpack.c.bf16 %v134, %v130
    %v327 = vpack.c.bf16 %v135, %v131
    %v328 = vpack.c.bf16 %v140, %v136
    %v329 = vpack.c.bf16 %v141, %v137
    %v330 = vpack.c.bf16 %v142, %v138
    %v331 = vpack.c.bf16 %v143, %v139
    %v332 = vpack.c.bf16 %v148, %v144
    %v333 = vpack.c.bf16 %v149, %v145
    %v334 = vpack.c.bf16 %v150, %v146
    %v335 = vpack.c.bf16 %v151, %v147
    %v336 = vpack.c.bf16 %v156, %v152
    %v337 = vpack.c.bf16 %v157, %v153
    %v338 = vpack.c.bf16 %v158, %v154
    %v339 = vpack.c.bf16 %v159, %v155
    %v340 = vpack.c.bf16 %v164, %v160
    %v341 = vpack.c.bf16 %v165, %v161
    %v342 = vpack.c.bf16 %v166, %v162
    %v343 = vpack.c.bf16 %v167, %v163
    %v344 = vpack.c.bf16 %v172, %v168
    %v345 = vpack.c.bf16 %v173, %v169
    %v346 = vpack.c.bf16 %v174, %v170
    %v347 = vpack.c.bf16 %v175, %v171
    %v348 = vpack.c.bf16 %v180, %v176
    %v349 = vpack.c.bf16 %v181, %v177
    %v350 = vpack.c.bf16 %v182, %v178
    %v351 = vpack.c.bf16 %v183, %v179
    %v352 = vpack.c.bf16 %v188, %v184
    %v353 = vpack.c.bf16 %v189, %v185
    %v354 = vpack.c.bf16 %v190, %v186
    %v355 = vpack.c.bf16 %v191, %v187
    %v356 = vpack.c.bf16 %v196, %v192
    %v357 = vpack.c.bf16 %v197, %v193
    %v358 = vpack.c.bf16 %v198, %v194
    %v359 = vpack.c.bf16 %v199, %v195
    %v360 = vpack.c.bf16 %v204, %v200
    %v361 = vpack.c.bf16 %v205, %v201
    %v362 = vpack.c.bf16 %v206, %v202
    %v363 = vpack.c.bf16 %v207, %v203
    %v364 = vpack.c.bf16 %v212, %v208
    %v365 = vpack.c.bf16 %v213, %v209
    %v366 = vpack.c.bf16 %v214, %v210
    %v367 = vpack.c.bf16 %v215, %v211
    %v368 = vpack.c.bf16 %v220, %v216
    %v369 = vpack.c.bf16 %v221, %v217
    %v370 = vpack.c.bf16 %v222, %v218
    %v371 = vpack.c.bf16 %v223, %v219
    %v372 = vpack.c.bf16 %v228, %v224
    %v373 = vpack.c.bf16 %v229, %v225
    %v374 = vpack.c.bf16 %v230, %v226
    %v375 = vpack.c.bf16 %v231, %v227
    %v376 = vpack.c.bf16 %v236, %v232
    %v377 = vpack.c.bf16 %v237, %v233
    %v378 = vpack.c.bf16 %v238, %v234
    %v379 = vpack.c.bf16 %v239, %v235
    %v380 = vpack.c.bf16 %v244, %v240
    %v381 = vpack.c.bf16 %v245, %v241
    %v382 = vpack.c.bf16 %v246, %v242
    %v383 = vpack.c.bf16 %v247, %v243
    %v384 = vpack.c.bf16 %v252, %v248
    %v385 = vpack.c.bf16 %v253, %v249
    %v386 = vpack.c.bf16 %v254, %v250
    %v387 = vpack.c.bf16 %v255, %v251
    %v388 = vpack.c.bf16 %v260, %v256
    %v389 = vpack.c.bf16 %v261, %v257
    %v390 = vpack.c.bf16 %v262, %v258
    %v391 = vpack.c.bf16 %v263, %v259
    %v392 = vpack.c.bf16 %v268, %v264
    %v393 = vpack.c.bf16 %v269, %v265
    %v394 = vpack.c.bf16 %v270, %v266
    %v395 = vpack.c.bf16 %v271, %v267
    %v396 = vpack.c.bf16 %v276, %v272
    %v397 = vpack.c.bf16 %v277, %v273
    %v398 = vpack.c.bf16 %v278, %v274
    %v399 = vpack.c.bf16 %v279, %v275
    %v400 = vpack.c.bf16 %v284, %v280
    %v401 = vpack.c.bf16 %v285, %v281
    %v402 = vpack.c.bf16 %v286, %v282
    %v403 = vpack.c.bf16 %v287, %v283
    %v404 = vpack.c.bf16 %v292, %v288
    %v405 = vpack.c.bf16 %v293, %v289
    %v406 = vpack.c.bf16 %v294, %v290
    %v407 = vpack.c.bf16 %v295, %v291
    %v408 = vld [vmem:[%s2] sm:$0xf]
    %v410 = vperm.slane %v408, 0
    %v411 = vperm.slane %v408, 1
    %v412 = vperm.slane %v408, 2
    %v413 = vperm.slane %v408, 3
    %vm418 = vcmask 506880
    %v420 = vsel %vm418, %v71, 0
    %vm422 = vcmask 1046528
    %v424 = vsel %vm422, %v404, 0
    %v427 = vsel %vm422, %v405, 0
    %v430 = vsel %vm422, %v406, 0
    %v433 = vsel %vm422, %v407, 0
    %435 = vmatpush.bf16.msra.mxu0 %v324
    %436 = vmatpush.bf16.msra.mxu0 %v320
    %437 = vmatpush.bf16.msra.mxu0 %v316
    %438 = vmatpush.bf16.msra.mxu0 %v312
    %439 = vmatpush.bf16.msra.mxu0 %v308
    %440 = vmatpush.bf16.msra.mxu0 %v304
    %441 = vmatpush.bf16.msra.mxu0 %v300
    %442 = vmatpush.bf16.msra.mxu0 %v296
    %443 = vmatmul.bf16.gmra.mxu0 %v68
    %v444 = vpop.f32.mrf.mxu0
    %v445 = vadd.f32 %v410, %v444
    %v446 = vpop.f32.mrf.mxu0
    %v447 = vadd.f32 %v410, %v446
    %448 = vdwg.mxu0
    %449 = vmatpush.bf16.msra.mxu0 %v356
    %450 = vmatpush.bf16.msra.mxu0 %v352
    %451 = vmatpush.bf16.msra.mxu0 %v348
    %452 = vmatpush.bf16.msra.mxu0 %v344
    %453 = vmatpush.bf16.msra.mxu0 %v340
    %454 = vmatpush.bf16.msra.mxu0 %v336
    %455 = vmatpush.bf16.msra.mxu0 %v332
    %456 = vmatpush.bf16.msra.mxu0 %v328
    %457 = vmatmul.bf16.gmra.mxu0 %v69
    %v458 = vpop.f32.mrf.mxu0
    %v459 = vadd.f32 %v445, %v458
    %v460 = vpop.f32.mrf.mxu0
    %v461 = vadd.f32 %v447, %v460
    %462 = vdwg.mxu0
    %463 = vmatpush.bf16.msra.mxu0 %v388
    %464 = vmatpush.bf16.msra.mxu0 %v384
    %465 = vmatpush.bf16.msra.mxu0 %v380
    %466 = vmatpush.bf16.msra.mxu0 %v376
    %467 = vmatpush.bf16.msra.mxu0 %v372
    %468 = vmatpush.bf16.msra.mxu0 %v368
    %469 = vmatpush.bf16.msra.mxu0 %v364
    %470 = vmatpush.bf16.msra.mxu0 %v360
    %471 = vmatmul.bf16.gmra.mxu0 %v70
    %v472 = vpop.f32.mrf.mxu0
    %v473 = vadd.f32 %v459, %v472
    %v474 = vpop.f32.mrf.mxu0
    %v475 = vadd.f32 %v461, %v474
    %476 = vdwg.mxu0
    %477 = vmatpush.bf16.msra.mxu0 0
    %478 = vmatpush.bf16.msra.mxu0 0
    %479 = vmatpush.bf16.msra.mxu0 0
    %480 = vmatpush.bf16.msra.mxu0 0
    %481 = vmatpush.bf16.msra.mxu0 %v424
    %482 = vmatpush.bf16.msra.mxu0 %v400
    %483 = vmatpush.bf16.msra.mxu0 %v396
    %484 = vmatpush.bf16.msra.mxu0 %v392
    %485 = vmatmul.bf16.gmra.mxu0 %v420
    %v486 = vpop.f32.mrf.mxu0
    %v487 = vadd.f32 %v473, %v486
    %v488 = vpop.f32.mrf.mxu0
    %v489 = vadd.f32 %v475, %v488
    %490 = vdwg.mxu0
    %491 = vmatpush.bf16.msra.mxu0 %v325
    %492 = vmatpush.bf16.msra.mxu0 %v321
    %493 = vmatpush.bf16.msra.mxu0 %v317
    %494 = vmatpush.bf16.msra.mxu0 %v313
    %495 = vmatpush.bf16.msra.mxu0 %v309
    %496 = vmatpush.bf16.msra.mxu0 %v305
    %497 = vmatpush.bf16.msra.mxu0 %v301
    %498 = vmatpush.bf16.msra.mxu0 %v297
    %499 = vmatmul.bf16.gmra.mxu0 %v68
    %v500 = vpop.f32.mrf.mxu0
    %v501 = vadd.f32 %v411, %v500
    %v502 = vpop.f32.mrf.mxu0
    %v503 = vadd.f32 %v411, %v502
    %504 = vdwg.mxu0
    %505 = vmatpush.bf16.msra.mxu0 %v357
    %506 = vmatpush.bf16.msra.mxu0 %v353
    %507 = vmatpush.bf16.msra.mxu0 %v349
    %508 = vmatpush.bf16.msra.mxu0 %v345
    %509 = vmatpush.bf16.msra.mxu0 %v341
    %510 = vmatpush.bf16.msra.mxu0 %v337
    %511 = vmatpush.bf16.msra.mxu0 %v333
    %512 = vmatpush.bf16.msra.mxu0 %v329
    %513 = vmatmul.bf16.gmra.mxu0 %v69
    %v514 = vpop.f32.mrf.mxu0
    %v515 = vadd.f32 %v501, %v514
    %v516 = vpop.f32.mrf.mxu0
    %v517 = vadd.f32 %v503, %v516
    %518 = vdwg.mxu0
    %519 = vmatpush.bf16.msra.mxu0 %v389
    %520 = vmatpush.bf16.msra.mxu0 %v385
    %521 = vmatpush.bf16.msra.mxu0 %v381
    %522 = vmatpush.bf16.msra.mxu0 %v377
    %523 = vmatpush.bf16.msra.mxu0 %v373
    %524 = vmatpush.bf16.msra.mxu0 %v369
    %525 = vmatpush.bf16.msra.mxu0 %v365
    %526 = vmatpush.bf16.msra.mxu0 %v361
    %527 = vmatmul.bf16.gmra.mxu0 %v70
    %v528 = vpop.f32.mrf.mxu0
    %v529 = vadd.f32 %v515, %v528
    %v530 = vpop.f32.mrf.mxu0
    %v531 = vadd.f32 %v517, %v530
    %532 = vdwg.mxu0
    %533 = vmatpush.bf16.msra.mxu0 0
    %534 = vmatpush.bf16.msra.mxu0 0
    %535 = vmatpush.bf16.msra.mxu0 0
    %536 = vmatpush.bf16.msra.mxu0 0
    %537 = vmatpush.bf16.msra.mxu0 %v427
    %538 = vmatpush.bf16.msra.mxu0 %v401
    %539 = vmatpush.bf16.msra.mxu0 %v397
    %540 = vmatpush.bf16.msra.mxu0 %v393
    %541 = vmatmul.bf16.gmra.mxu0 %v420
    %v542 = vpop.f32.mrf.mxu0
    %v543 = vadd.f32 %v529, %v542
    %v544 = vpop.f32.mrf.mxu0
    %v545 = vadd.f32 %v531, %v544
    %546 = vdwg.mxu0
    %547 = vmatpush.bf16.msra.mxu0 %v326
    %548 = vmatpush.bf16.msra.mxu0 %v322
    %549 = vmatpush.bf16.msra.mxu0 %v318
    %550 = vmatpush.bf16.msra.mxu0 %v314
    %551 = vmatpush.bf16.msra.mxu0 %v310
    %552 = vmatpush.bf16.msra.mxu0 %v306
    %553 = vmatpush.bf16.msra.mxu0 %v302
    %554 = vmatpush.bf16.msra.mxu0 %v298
    %555 = vmatmul.bf16.gmra.mxu0 %v68
    %v556 = vpop.f32.mrf.mxu0
    %v557 = vadd.f32 %v412, %v556
    %v558 = vpop.f32.mrf.mxu0
    %v559 = vadd.f32 %v412, %v558
    %560 = vdwg.mxu0
    %561 = vmatpush.bf16.msra.mxu0 %v358
    %562 = vmatpush.bf16.msra.mxu0 %v354
    %563 = vmatpush.bf16.msra.mxu0 %v350
    %564 = vmatpush.bf16.msra.mxu0 %v346
    %565 = vmatpush.bf16.msra.mxu0 %v342
    %566 = vmatpush.bf16.msra.mxu0 %v338
    %567 = vmatpush.bf16.msra.mxu0 %v334
    %568 = vmatpush.bf16.msra.mxu0 %v330
    %569 = vmatmul.bf16.gmra.mxu0 %v69
    %v570 = vpop.f32.mrf.mxu0
    %v571 = vadd.f32 %v557, %v570
    %v572 = vpop.f32.mrf.mxu0
    %v573 = vadd.f32 %v559, %v572
    %574 = vdwg.mxu0
    %575 = vmatpush.bf16.msra.mxu0 %v390
    %576 = vmatpush.bf16.msra.mxu0 %v386
    %577 = vmatpush.bf16.msra.mxu0 %v382
    %578 = vmatpush.bf16.msra.mxu0 %v378
    %579 = vmatpush.bf16.msra.mxu0 %v374
    %580 = vmatpush.bf16.msra.mxu0 %v370
    %581 = vmatpush.bf16.msra.mxu0 %v366
    %582 = vmatpush.bf16.msra.mxu0 %v362
    %583 = vmatmul.bf16.gmra.mxu0 %v70
    %v584 = vpop.f32.mrf.mxu0
    %v585 = vadd.f32 %v571, %v584
    %v586 = vpop.f32.mrf.mxu0
    %v587 = vadd.f32 %v573, %v586
    %588 = vdwg.mxu0
    %589 = vmatpush.bf16.msra.mxu0 0
    %590 = vmatpush.bf16.msra.mxu0 0
    %591 = vmatpush.bf16.msra.mxu0 0
    %592 = vmatpush.bf16.msra.mxu0 0
    %593 = vmatpush.bf16.msra.mxu0 %v430
    %594 = vmatpush.bf16.msra.mxu0 %v402
    %595 = vmatpush.bf16.msra.mxu0 %v398
    %596 = vmatpush.bf16.msra.mxu0 %v394
    %597 = vmatmul.bf16.gmra.mxu0 %v420
    %v598 = vpop.f32.mrf.mxu0
    %v599 = vadd.f32 %v585, %v598
    %v600 = vpop.f32.mrf.mxu0
    %v601 = vadd.f32 %v587, %v600
    %602 = vdwg.mxu0
    %603 = vmatpush.bf16.msra.mxu0 %v327
    %604 = vmatpush.bf16.msra.mxu0 %v323
    %605 = vmatpush.bf16.msra.mxu0 %v319
    %606 = vmatpush.bf16.msra.mxu0 %v315
    %607 = vmatpush.bf16.msra.mxu0 %v311
    %608 = vmatpush.bf16.msra.mxu0 %v307
    %609 = vmatpush.bf16.msra.mxu0 %v303
    %610 = vmatpush.bf16.msra.mxu0 %v299
    %611 = vmatmul.bf16.gmra.mxu0 %v68
    %v612 = vpop.f32.mrf.mxu0
    %v613 = vadd.f32 %v413, %v612
    %v614 = vpop.f32.mrf.mxu0
    %v615 = vadd.f32 %v413, %v614
    %616 = vdwg.mxu0
    %617 = vmatpush.bf16.msra.mxu0 %v359
    %618 = vmatpush.bf16.msra.mxu0 %v355
    %619 = vmatpush.bf16.msra.mxu0 %v351
    %620 = vmatpush.bf16.msra.mxu0 %v347
    %621 = vmatpush.bf16.msra.mxu0 %v343
    %622 = vmatpush.bf16.msra.mxu0 %v339
    %623 = vmatpush.bf16.msra.mxu0 %v335
    %624 = vmatpush.bf16.msra.mxu0 %v331
    %625 = vmatmul.bf16.gmra.mxu0 %v69
    %v626 = vpop.f32.mrf.mxu0
    %v627 = vadd.f32 %v613, %v626
    %v628 = vpop.f32.mrf.mxu0
    %v629 = vadd.f32 %v615, %v628
    %630 = vdwg.mxu0
    %631 = vmatpush.bf16.msra.mxu0 %v391
    %632 = vmatpush.bf16.msra.mxu0 %v387
    %633 = vmatpush.bf16.msra.mxu0 %v383
    %634 = vmatpush.bf16.msra.mxu0 %v379
    %635 = vmatpush.bf16.msra.mxu0 %v375
    %636 = vmatpush.bf16.msra.mxu0 %v371
    %637 = vmatpush.bf16.msra.mxu0 %v367
    %638 = vmatpush.bf16.msra.mxu0 %v363
    %639 = vmatmul.bf16.gmra.mxu0 %v70
    %v640 = vpop.f32.mrf.mxu0
    %v641 = vadd.f32 %v627, %v640
    %v642 = vpop.f32.mrf.mxu0
    %v643 = vadd.f32 %v629, %v642
    %644 = vdwg.mxu0
    %645 = vmatpush.bf16.msra.mxu0 0
    %646 = vmatpush.bf16.msra.mxu0 0
    %647 = vmatpush.bf16.msra.mxu0 0
    %648 = vmatpush.bf16.msra.mxu0 0
    %649 = vmatpush.bf16.msra.mxu0 %v433
    %650 = vmatpush.bf16.msra.mxu0 %v403
    %651 = vmatpush.bf16.msra.mxu0 %v399
    %652 = vmatpush.bf16.msra.mxu0 %v395
    %653 = vmatmul.bf16.gmra.mxu0 %v420
    %v654 = vpop.f32.mrf.mxu0
    %v655 = vadd.f32 %v641, %v654
    %v656 = vpop.f32.mrf.mxu0
    %v657 = vadd.f32 %v643, %v656
    %658 = vdwg.mxu0
    %v659 = vmax.f32 %v487, 0.0
    %v660 = vmax.f32 %v543, 0.0
    %v661 = vmax.f32 %v599, 0.0
    %v662 = vmax.f32 %v655, 0.0
    %v663 = vmax.f32 %v489, 0.0
    %v664 = vmax.f32 %v545, 0.0
    %v665 = vmax.f32 %v601, 0.0
    %v666 = vmax.f32 %v657, 0.0
    %v667 = vpack.c.bf16 %v663, %v659
    %v668 = vpack.c.bf16 %v664, %v660
    %v669 = vpack.c.bf16 %v665, %v661
    %v670 = vpack.c.bf16 %v666, %v662
    %v671 = vld [vmem:[#allocation5] sm:$0xff]
    %v672 = vld [vmem:[#allocation5 + $0x8] sm:$0xff]
    %v673 = vld [vmem:[#allocation5 + $0x10] sm:$0xff]
    %v674 = vld [vmem:[#allocation5 + $0x18] sm:$0xff]
    %v675 = vld [vmem:[#allocation5 + $0x20] sm:$0xff]
    %v676 = vld [vmem:[#allocation5 + $0x28] sm:$0xff]
    %v677 = vld [vmem:[#allocation5 + $0x30] sm:$0xff]
    %v678 = vld [vmem:[#allocation5 + $0x38] sm:$0xff]
    %v679 = vld [vmem:[#allocation5 + $0x40] sm:$0xff]
    %v680 = vld [vmem:[#allocation5 + $0x48] sm:$0xff]
    %v681 = vld [vmem:[#allocation5 + $0x50] sm:$0xff]
    %v682 = vld [vmem:[#allocation5 + $0x58] sm:$0xff]
    %v683 = vld [vmem:[#allocation5 + $0x60] sm:$0xff]
    %v684 = vld [vmem:[#allocation5 + $0x68] sm:$0xff]
    %v685 = vld [vmem:[#allocation5 + $0x70] sm:$0xff]
    %v686 = vld [vmem:[#allocation5 + $0x78] sm:$0xff]
    %v687 = vld [vmem:[#allocation5 + $0x80] sm:$0xff]
    %v688 = vld [vmem:[#allocation5 + $0x88] sm:$0xff]
    %v689 = vld [vmem:[#allocation5 + $0x90] sm:$0xff]
    %v690 = vld [vmem:[#allocation5 + $0x98] sm:$0xff]
    %v691 = vld [vmem:[#allocation5 + $0xa0] sm:$0xff]
    %v692 = vld [vmem:[#allocation5 + $0xa8] sm:$0xff]
    %v693 = vld [vmem:[#allocation5 + $0xb0] sm:$0xff]
    %v694 = vld [vmem:[#allocation5 + $0xb8] sm:$0xff]
    %v695 = vld [vmem:[#allocation5 + $0xc0] sm:$0xff]
    %v696 = vld [vmem:[#allocation5 + $0xc8] sm:$0xff]
    %v697 = vld [vmem:[#allocation5 + $0xd0] sm:$0xff]
    %v698 = vld [vmem:[#allocation5 + $0xd8] sm:$0xff]
    %v699 = vld [vmem:[#allocation5 + $0xe0] sm:$0xff]
    %v700 = vld [vmem:[#allocation5 + $0xe8] sm:$0xff]
    %v701 = vld [vmem:[#allocation5 + $0xf0] sm:$0xff]
    %v702 = vld [vmem:[#allocation5 + $0xf8] sm:$0xff]
    %v703 = vld [vmem:[#allocation5 + $0x100] sm:$0xff]
    %v704 = vld [vmem:[#allocation5 + $0x108] sm:$0xff]
    %v705 = vld [vmem:[#allocation5 + $0x110] sm:$0xff]
    %v706 = vld [vmem:[#allocation5 + $0x118] sm:$0xff]
    %v707 = vld [vmem:[#allocation5 + $0x120] sm:$0xff]
    %v708 = vld [vmem:[#allocation5 + $0x128] sm:$0xff]
    %v709 = vld [vmem:[#allocation5 + $0x130] sm:$0xff]
    %v710 = vld [vmem:[#allocation5 + $0x138] sm:$0xff]
    %v711 = vld [vmem:[#allocation5 + $0x140] sm:$0xff]
    %v712 = vld [vmem:[#allocation5 + $0x148] sm:$0xff]
    %v713 = vld [vmem:[#allocation5 + $0x150] sm:$0xff]
    %v714 = vld [vmem:[#allocation5 + $0x158] sm:$0xff]
    %v715 = vld [vmem:[#allocation5 + $0x160] sm:$0xff]
    %v716 = vld [vmem:[#allocation5 + $0x168] sm:$0xff]
    %v717 = vld [vmem:[#allocation5 + $0x170] sm:$0xff]
    %v718 = vld [vmem:[#allocation5 + $0x178] sm:$0xff]
    %v719 = vld [vmem:[#allocation5 + $0x180] sm:$0xff]
    %v720 = vld [vmem:[#allocation5 + $0x188] sm:$0xff]
    %v721 = vld [vmem:[#allocation5 + $0x190] sm:$0xff]
    %v722 = vld [vmem:[#allocation5 + $0x198] sm:$0xff]
    %v723 = vld [vmem:[#allocation5 + $0x1a0] sm:$0xff]
    %v724 = vld [vmem:[#allocation5 + $0x1a8] sm:$0xff]
    %v725 = vld [vmem:[#allocation5 + $0x1b0] sm:$0xff]
    %v726 = vld [vmem:[#allocation5 + $0x1b8] sm:$0xff]
    %v727 = vld [vmem:[#allocation5 + $0x1c0] sm:$0xff]
    %v728 = vld [vmem:[#allocation5 + $0x1c8] sm:$0xff]
    %v729 = vld [vmem:[#allocation5 + $0x1d0] sm:$0xff]
    %v730 = vld [vmem:[#allocation5 + $0x1d8] sm:$0xff]
    %v731 = vld [vmem:[#allocation5 + $0x1e0] sm:$0xff]
    %v732 = vld [vmem:[#allocation5 + $0x1e8] sm:$0xff]
    %v733 = vld [vmem:[#allocation5 + $0x1f0] sm:$0xff]
    %v734 = vld [vmem:[#allocation5 + $0x1f8] sm:$0xff]
    %v735 = vpack.c.bf16 %v672, %v671
    %v736 = vpack.c.bf16 %v674, %v673
    %v737 = vpack.c.bf16 %v676, %v675
    %v738 = vpack.c.bf16 %v678, %v677
    %v739 = vpack.c.bf16 %v680, %v679
    %v740 = vpack.c.bf16 %v682, %v681
    %v741 = vpack.c.bf16 %v684, %v683
    %v742 = vpack.c.bf16 %v686, %v685
    %v743 = vpack.c.bf16 %v688, %v687
    %v744 = vpack.c.bf16 %v690, %v689
    %v745 = vpack.c.bf16 %v692, %v691
    %v746 = vpack.c.bf16 %v694, %v693
    %v747 = vpack.c.bf16 %v696, %v695
    %v748 = vpack.c.bf16 %v698, %v697
    %v749 = vpack.c.bf16 %v700, %v699
    %v750 = vpack.c.bf16 %v702, %v701
    %v751 = vpack.c.bf16 %v704, %v703
    %v752 = vpack.c.bf16 %v706, %v705
    %v753 = vpack.c.bf16 %v708, %v707
    %v754 = vpack.c.bf16 %v710, %v709
    %v755 = vpack.c.bf16 %v712, %v711
    %v756 = vpack.c.bf16 %v714, %v713
    %v757 = vpack.c.bf16 %v716, %v715
    %v758 = vpack.c.bf16 %v718, %v717
    %v759 = vpack.c.bf16 %v720, %v719
    %v760 = vpack.c.bf16 %v722, %v721
    %v761 = vpack.c.bf16 %v724, %v723
    %v762 = vpack.c.bf16 %v726, %v725
    %v763 = vpack.c.bf16 %v728, %v727
    %v764 = vpack.c.bf16 %v730, %v729
    %v765 = vpack.c.bf16 %v732, %v731
    %v766 = vpack.c.bf16 %v734, %v733
    %v767 = vld [vmem:[%s4] sm:$0x1]
    %v769 = vperm.slane %v767, 0
    %771 = vmatpush.bf16.msra.mxu0 %v742
    %772 = vmatpush.bf16.msra.mxu0 %v741
    %773 = vmatpush.bf16.msra.mxu0 %v740
    %774 = vmatpush.bf16.msra.mxu0 %v739
    %775 = vmatpush.bf16.msra.mxu0 %v738
    %776 = vmatpush.bf16.msra.mxu0 %v737
    %777 = vmatpush.bf16.msra.mxu0 %v736
    %778 = vmatpush.bf16.msra.mxu0 %v735
    %779 = vmatmul.bf16.gmra.mxu0 %v667
    %v780 = vpop.f32.mrf.mxu0
    %v781 = vadd.f32 %v769, %v780
    %v782 = vpop.f32.mrf.mxu0
    %v783 = vadd.f32 %v769, %v782
    %784 = vdwg.mxu0
    %785 = vmatpush.bf16.msra.mxu0 %v750
    %786 = vmatpush.bf16.msra.mxu0 %v749
    %787 = vmatpush.bf16.msra.mxu0 %v748
    %788 = vmatpush.bf16.msra.mxu0 %v747
    %789 = vmatpush.bf16.msra.mxu0 %v746
    %790 = vmatpush.bf16.msra.mxu0 %v745
    %791 = vmatpush.bf16.msra.mxu0 %v744
    %792 = vmatpush.bf16.msra.mxu0 %v743
    %793 = vmatmul.bf16.gmra.mxu0 %v668
    %v794 = vpop.f32.mrf.mxu0
    %v795 = vadd.f32 %v781, %v794
    %v796 = vpop.f32.mrf.mxu0
    %v797 = vadd.f32 %v783, %v796
    %798 = vdwg.mxu0
    %799 = vmatpush.bf16.msra.mxu0 %v758
    %800 = vmatpush.bf16.msra.mxu0 %v757
    %801 = vmatpush.bf16.msra.mxu0 %v756
    %802 = vmatpush.bf16.msra.mxu0 %v755
    %803 = vmatpush.bf16.msra.mxu0 %v754
    %804 = vmatpush.bf16.msra.mxu0 %v753
    %805 = vmatpush.bf16.msra.mxu0 %v752
    %806 = vmatpush.bf16.msra.mxu0 %v751
    %807 = vmatmul.bf16.gmra.mxu0 %v669
    %v808 = vpop.f32.mrf.mxu0
    %v809 = vadd.f32 %v795, %v808
    %v810 = vpop.f32.mrf.mxu0
    %v811 = vadd.f32 %v797, %v810
    %812 = vdwg.mxu0
    %813 = vmatpush.bf16.msra.mxu0 %v766
    %814 = vmatpush.bf16.msra.mxu0 %v765
    %815 = vmatpush.bf16.msra.mxu0 %v764
    %816 = vmatpush.bf16.msra.mxu0 %v763
    %817 = vmatpush.bf16.msra.mxu0 %v762
    %818 = vmatpush.bf16.msra.mxu0 %v761
    %819 = vmatpush.bf16.msra.mxu0 %v760
    %820 = vmatpush.bf16.msra.mxu0 %v759
    %821 = vmatmul.bf16.gmra.mxu0 %v670
    %v822 = vpop.f32.mrf.mxu0
    %v823 = vadd.f32 %v809, %v822
    %v824 = vpop.f32.mrf.mxu0
    %v825 = vadd.f32 %v811, %v824
    %826 = vdwg.mxu0
    %v827 = vmax.f32 %v823, 0.0
    %v828 = vmax.f32 %v825, 0.0
    %v829 = vpack.c.bf16 %v828, %v827
    %v830 = vld [vmem:[%s5] sm:$0xff]
    %v831 = vld [vmem:[%s5 + $0x8] sm:$0xff]
    %v832 = vld [vmem:[%s5 + $0x10] sm:$0xff]
    %v833 = vld [vmem:[%s5 + $0x18] sm:$0xff]
    %v834 = vld [vmem:[%s5 + $0x20] sm:$0xff]
    %v835 = vld [vmem:[%s5 + $0x28] sm:$0xff]
    %v836 = vld [vmem:[%s5 + $0x30] sm:$0xff]
    %v837 = vld [vmem:[%s5 + $0x38] sm:$0xff]
    %v838 = vld [vmem:[%s5 + $0x40] sm:$0xff]
    %v839 = vld [vmem:[%s5 + $0x48] sm:$0xff]
    %v840 = vld [vmem:[%s5 + $0x50] sm:$0xff]
    %v841 = vld [vmem:[%s5 + $0x58] sm:$0xff]
    %v842 = vld [vmem:[%s5 + $0x60] sm:$0xff]
    %v843 = vld [vmem:[%s5 + $0x68] sm:$0xff]
    %v844 = vld [vmem:[%s5 + $0x70] sm:$0xff]
    %v845 = vld [vmem:[%s5 + $0x78] sm:$0xff]
    %v846 = vpack.c.bf16 %v831, %v830
    %v847 = vpack.c.bf16 %v833, %v832
    %v848 = vpack.c.bf16 %v835, %v834
    %v849 = vpack.c.bf16 %v837, %v836
    %v850 = vpack.c.bf16 %v839, %v838
    %v851 = vpack.c.bf16 %v841, %v840
    %v852 = vpack.c.bf16 %v843, %v842
    %v853 = vpack.c.bf16 %v845, %v844
    %v854 = vld [vmem:[%s6] sm:$0x1]
    %v856 = vperm.slane %v854, 0
    %858 = vmatpush.bf16.msra.mxu0 %v853
    %859 = vmatpush.bf16.msra.mxu0 %v852
    %860 = vmatpush.bf16.msra.mxu0 %v851
    %861 = vmatpush.bf16.msra.mxu0 %v850
    %862 = vmatpush.bf16.msra.mxu0 %v849
    %863 = vmatpush.bf16.msra.mxu0 %v848
    %864 = vmatpush.bf16.msra.mxu0 %v847
    %865 = vmatpush.bf16.msra.mxu0 %v846
    %866 = vmatmul.bf16.gmra.mxu0 %v829
    %v867 = vpop.f32.mrf.mxu0
    %v868 = vadd.f32 %v856, %v867
    %v869 = vpop.f32.mrf.mxu0
    %v870 = vadd.f32 %v856, %v869
    %871 = vdwg.mxu0
    %vm872 = vcmask 244736
    %873 = vst.msk [vmem:[#allocation7] sm:$0xff] %vm872, %v868
    %874 = vst.msk [vmem:[#allocation7 + $0x8] sm:$0xff] %vm872, %v870
    // Predicated region
    $region38: #{model_location30_forward.1} parent=1 // pred_check
      _
    $region39: #{model_location30_forward.1} parent=1 // pred_check_branch
      %876 = sbr.rel (0) target = $region41
    $region40: #{model_location30_forward.1} parent=1 // pred_region
      %878 = vsyncadd [#allocation4], 0
      %s879 = sshll.u32 [#allocation7], 4
      %s880 = int_to_ptr.vmem [resolvable:$true] %s879
      %s881 = sshll.u32 %s7, 4
      %s882 = int_to_ptr.hbm [resolvable:$true] %s881
      %887 = dma.vmem_to_hbm [thread:$0]  %s880, 256, %s882, [#allocation4], 128, 128, 8
    $region41: #{model_location30_forward.1} parent=1 // pred_fallthru
      _
    // Predicated region
    $region42: #{model_location30_forward.1} parent=1 // pred_check
      _
    $region43: #{model_location30_forward.1} parent=1 // pred_check_branch
      %889 = sbr.rel (0) target = $region45
    $region44: #{model_location30_forward.1} parent=1 // pred_region
      %891 = dma.done [#allocation4], 256
    $region45: #{model_location30_forward.1} parent=1 // pred_fallthru
      _
    %892 = vsyncpa [#allocation3], 1
    %893 = vsyncpa [#allocation6], 1
    %894 = vsyncpa [#allocation4], 1

</llo_original>
